<compile_context>
chip_gen: v5e
topology: v5e:2x2
jax: 0.10.0
libtpu: 0.0.40
codegen_flags: <defaults>
</compile_context>

<pallas_src>
import jax
import jax.numpy as jnp
from jax.experimental import pallas as pl
from jax.experimental.pallas import tpu as pltpu


def _round_up(x, m):
    return ((x + m - 1) // m) * m


def mlp_kernel(x_ref, w1_ref, b1_ref, w2_ref, b2_ref, w3_ref, b3_ref, o_ref):
    # One batch tile resident in VMEM; three MXU matmuls + VPU ReLUs fused.
    cd = w1_ref.dtype                                                  # compute dtype (bf16)
    x = x_ref[...]                                                     # (tb, n_inp)
    h1 = jnp.dot(x, w1_ref[...], preferred_element_type=jnp.float32) + b1_ref[...]
    h1 = jnp.maximum(h1, 0.0)                                          # (tb, 128) f32
    h2 = jnp.dot(h1.astype(cd), w2_ref[...],
                 preferred_element_type=jnp.float32) + b2_ref[...]
    h2 = jnp.maximum(h2, 0.0)                                          # (tb, 128) f32
    out = jnp.dot(h2.astype(cd), w3_ref[...],
                  preferred_element_type=jnp.float32) + b3_ref[...]
    o_ref[...] = out.astype(o_ref.dtype)                               # (tb, Cp) lane-dense


def mlp_forward(x, params, *, tb=256, compute_dtype=jnp.bfloat16):
    """x: (B, n_inp) float32. params: dict of w1,b1,w2,b2,w3,b3 (f32, (in,out))."""
    B, n_inp = x.shape
    w1, b1 = params["w1"], params["b1"]
    w2, b2 = params["w2"], params["b2"]
    w3, b3 = params["w3"], params["b3"]
    H1, H2 = w1.shape[1], w2.shape[1]
    num_classes = w3.shape[1]

    assert tb % 128 == 0, "batch tile should be a multiple of 128 (MXU M dim)"

    # Pad hidden / class dims to 128 lanes and batch to a tile multiple.
    # Zero padding is exact: padded weight rows/cols and bias entries are 0.
    H1p = _round_up(H1, 128)
    H2p = _round_up(H2, 128)
    Cp = _round_up(num_classes, 128)
    Bp = _round_up(max(B, tb), tb)

    cd = compute_dtype
    f32 = jnp.float32
    xp = jnp.zeros((Bp, n_inp), cd).at[:B].set(x.astype(cd))
    w1p = jnp.zeros((n_inp, H1p), cd).at[:, :H1].set(w1.astype(cd))
    w2p = jnp.zeros((H1p, H2p), cd).at[:H1, :H2].set(w2.astype(cd))
    w3p = jnp.zeros((H2p, Cp), cd).at[:H2, :num_classes].set(w3.astype(cd))
    b1p = jnp.zeros((1, H1p), f32).at[:, :H1].set(b1.astype(f32))
    b2p = jnp.zeros((1, H2p), f32).at[:, :H2].set(b2.astype(f32))
    b3p = jnp.zeros((1, Cp), f32).at[:, :num_classes].set(b3.astype(f32))

    grid = (Bp // tb,)
    const = lambda shape: pl.BlockSpec(shape, lambda i: (0,) * len(shape))

    out = pl.pallas_call(
        mlp_kernel,
        out_shape=jax.ShapeDtypeStruct((Bp, Cp), jnp.float32),
        grid_spec=pl.GridSpec(
            grid=grid,
            in_specs=[
                pl.BlockSpec((tb, n_inp), lambda i: (i, 0)),   # x: tiled over batch
                const((n_inp, H1p)), const((1, H1p)),          # w1, b1 (constant blocks)
                const((H1p, H2p)), const((1, H2p)),            # w2, b2
                const((H2p, Cp)), const((1, Cp)),              # w3, b3
            ],
            out_specs=pl.BlockSpec((tb, Cp), lambda i: (i, 0)),
        ),
        compiler_params=pltpu.CompilerParams(
            dimension_semantics=("parallel",),      # shard batch tiles across TCs (v7x)
            vmem_limit_bytes=32 * 1024 * 1024,      # safe on v5e/v6e/v7x for these tiles
        ),
    )(xp, w1p, b1p, w2p, b2p, w3p, b3p)

    return out[:B, :num_classes]


def init_params(key, n_inp, num_classes=1):
    """Deterministic PyTorch-style init; weights stored as (in, out), f32."""
    ks = jax.random.split(key, 6)

    def lin(kw, kb, fan_in, fan_out):
        bound = 1.0 / jnp.sqrt(fan_in)
        w = jax.random.uniform(kw, (fan_in, fan_out), jnp.float32, -bound, bound)
        b = jax.random.uniform(kb, (1, fan_out), jnp.float32, -bound, bound)
        return w, b

    w1, b1 = lin(ks[0], ks[1], n_inp, 64)
    w2, b2 = lin(ks[2], ks[3], 64, 16)
    w3, b3 = lin(ks[4], ks[5], 16, num_classes)
    return dict(w1=w1, b1=b1, w2=w2, b2=b2, w3=w3, b3=b3)


def mlp_ref_matched(x, p, cd=jnp.bfloat16):
    """Reference with the same bf16-input / f32-accumulate recipe as the kernel."""
    h1 = jnp.maximum(jnp.dot(x.astype(cd), p["w1"].astype(cd),
                             preferred_element_type=jnp.float32) + p["b1"], 0.0)
    h2 = jnp.maximum(jnp.dot(h1.astype(cd), p["w2"].astype(cd),
                             preferred_element_type=jnp.float32) + p["b2"], 0.0)
    return jnp.dot(h2.astype(cd), p["w3"].astype(cd),
                   preferred_element_type=jnp.float32) + p["b3"]


def mlp_ref_f32(x, p):
    h1 = jnp.maximum(x @ p["w1"] + p["b1"], 0.0)
    h2 = jnp.maximum(h1 @ p["w2"] + p["b2"], 0.0)
    return h2 @ p["w3"] + p["b3"]


if __name__ == "__main__":
    key = jax.random.PRNGKey(0)
    kx, kp = jax.random.split(key)

    B, n_inp, num_classes = 16, 32, 1
    x = jax.random.normal(kx, (B, n_inp), jnp.float32)
    params = init_params(kp, n_inp, num_classes)

    out = jax.block_until_ready(mlp_forward(x, params))
    assert out.shape == (B, num_classes)

    # Exact check against a reference using the identical mixed-precision recipe.
    ref_m = mlp_ref_matched(x, params)
    assert jnp.allclose(out, ref_m, atol=1e-3, rtol=1e-3), "mismatch vs matched reference"

    # Loose check against the pure-f32 PyTorch-equivalent forward (bf16 weight quant).
    ref_f = mlp_ref_f32(x, params)
    assert jnp.allclose(out, ref_f, atol=1e-1, rtol=1e-1), "mismatch vs f32 reference"

    print("KERNEL_OK")
</pallas_src>

<mosaic_0001>
module attributes {stable_mosaic.version = 11 : i64} {
  func.func @mlp_kernel(%arg0: i32, %arg1: memref<256x32xbf16, #tpu.memory_space<vmem>>, %arg2: memref<32x128xbf16, #tpu.memory_space<vmem>>, %arg3: memref<1x128xf32, #tpu.memory_space<vmem>>, %arg4: memref<128x128xbf16, #tpu.memory_space<vmem>>, %arg5: memref<1x128xf32, #tpu.memory_space<vmem>>, %arg6: memref<128x128xbf16, #tpu.memory_space<vmem>>, %arg7: memref<1x128xf32, #tpu.memory_space<vmem>>, %arg8: memref<256x128xf32, #tpu.memory_space<vmem>>) attributes {dimension_semantics = [#tpu.dimension_semantics<parallel>], iteration_bounds = array<i64: 1>, scalar_prefetch = 0 : i64, scratch_operands = 0 : i64, tpu.core_type = #tpu.core_type<tc>, window_params = [{transform_indices = @transform_0, window_bounds = array<i64: 256, 32>}, {pipeline_mode = #tpu.pipeline_mode<synchronous>, transform_indices = @transform_1, window_bounds = array<i64: 32, 128>}, {pipeline_mode = #tpu.pipeline_mode<synchronous>, transform_indices = @transform_2, window_bounds = array<i64: 1, 128>}, {pipeline_mode = #tpu.pipeline_mode<synchronous>, transform_indices = @transform_3, window_bounds = array<i64: 128, 128>}, {pipeline_mode = #tpu.pipeline_mode<synchronous>, transform_indices = @transform_4, window_bounds = array<i64: 1, 128>}, {pipeline_mode = #tpu.pipeline_mode<synchronous>, transform_indices = @transform_5, window_bounds = array<i64: 128, 128>}, {pipeline_mode = #tpu.pipeline_mode<synchronous>, transform_indices = @transform_6, window_bounds = array<i64: 1, 128>}, {transform_indices = @transform_7, window_bounds = array<i64: 256, 128>}]} {
    %c0 = arith.constant 0 : index
    %c0_0 = arith.constant 0 : index
    %0 = vector.load %arg1[%c0, %c0_0] : memref<256x32xbf16, #tpu.memory_space<vmem>>, vector<256x32xbf16>
    %c0_1 = arith.constant 0 : index
    %c0_2 = arith.constant 0 : index
    %1 = vector.load %arg2[%c0_1, %c0_2] : memref<32x128xbf16, #tpu.memory_space<vmem>>, vector<32x128xbf16>
    %cst = arith.constant dense<0.000000e+00> : vector<256x128xf32>
    %2 = tpu.matmul %0, %1, %cst {dimension_numbers = #tpu.dot_dimension_numbers<[1], [0], [0], [1], [0, 0, 1, 1], [], []>} : vector<256x32xbf16>, vector<32x128xbf16>, vector<256x128xf32> -> vector<256x128xf32>
    %c0_3 = arith.constant 0 : index
    %c0_4 = arith.constant 0 : index
    %3 = vector.load %arg3[%c0_3, %c0_4] : memref<1x128xf32, #tpu.memory_space<vmem>>, vector<1x128xf32>
    %4 = vector.broadcast %3 : vector<1x128xf32> to vector<256x128xf32>
    %5 = arith.addf %2, %4 : vector<256x128xf32>
    %cst_5 = arith.constant 0.000000e+00 : f32
    %6 = vector.broadcast %cst_5 : f32 to vector<256x128xf32>
    %7 = arith.maximumf %5, %6 : vector<256x128xf32>
    %8 = arith.truncf %7 : vector<256x128xf32> to vector<256x128xbf16>
    %c0_6 = arith.constant 0 : index
    %c0_7 = arith.constant 0 : index
    %9 = vector.load %arg4[%c0_6, %c0_7] : memref<128x128xbf16, #tpu.memory_space<vmem>>, vector<128x128xbf16>
    %cst_8 = arith.constant dense<0.000000e+00> : vector<256x128xf32>
    %10 = tpu.matmul %8, %9, %cst_8 {dimension_numbers = #tpu.dot_dimension_numbers<[1], [0], [0], [1], [0, 0, 1, 1], [], []>} : vector<256x128xbf16>, vector<128x128xbf16>, vector<256x128xf32> -> vector<256x128xf32>
    %c0_9 = arith.constant 0 : index
    %c0_10 = arith.constant 0 : index
    %11 = vector.load %arg5[%c0_9, %c0_10] : memref<1x128xf32, #tpu.memory_space<vmem>>, vector<1x128xf32>
    %12 = vector.broadcast %11 : vector<1x128xf32> to vector<256x128xf32>
    %13 = arith.addf %10, %12 : vector<256x128xf32>
    %cst_11 = arith.constant 0.000000e+00 : f32
    %14 = vector.broadcast %cst_11 : f32 to vector<256x128xf32>
    %15 = arith.maximumf %13, %14 : vector<256x128xf32>
    %16 = arith.truncf %15 : vector<256x128xf32> to vector<256x128xbf16>
    %c0_12 = arith.constant 0 : index
    %c0_13 = arith.constant 0 : index
    %17 = vector.load %arg6[%c0_12, %c0_13] : memref<128x128xbf16, #tpu.memory_space<vmem>>, vector<128x128xbf16>
    %cst_14 = arith.constant dense<0.000000e+00> : vector<256x128xf32>
    %18 = tpu.matmul %16, %17, %cst_14 {dimension_numbers = #tpu.dot_dimension_numbers<[1], [0], [0], [1], [0, 0, 1, 1], [], []>} : vector<256x128xbf16>, vector<128x128xbf16>, vector<256x128xf32> -> vector<256x128xf32>
    %c0_15 = arith.constant 0 : index
    %c0_16 = arith.constant 0 : index
    %19 = vector.load %arg7[%c0_15, %c0_16] : memref<1x128xf32, #tpu.memory_space<vmem>>, vector<1x128xf32>
    %20 = vector.broadcast %19 : vector<1x128xf32> to vector<256x128xf32>
    %21 = arith.addf %18, %20 : vector<256x128xf32>
    %c0_17 = arith.constant 0 : index
    %c0_18 = arith.constant 0 : index
    %22 = vector.load %arg8[%c0_17, %c0_18] : memref<256x128xf32, #tpu.memory_space<vmem>>, vector<256x128xf32>
    tpu.vector_store %arg8[%c0_17, %c0_18], %21 {strides = array<i32>} : memref<256x128xf32, #tpu.memory_space<vmem>>, vector<256x128xf32>,
    return
  }
  func.func @transform_0(%arg0: i32) -> (i32, i32) {
    %c0_i32 = arith.constant 0 : i32
    %c0_i32_0 = arith.constant 0 : i32
    return %arg0, %c0_i32 : i32, i32
  }
  func.func @transform_1(%arg0: i32) -> (i32, i32) {
    %c0_i32 = arith.constant 0 : i32
    %c0_i32_0 = arith.constant 0 : i32
    %c0_i32_1 = arith.constant 0 : i32
    return %c0_i32, %c0_i32_0 : i32, i32
  }
  func.func @transform_2(%arg0: i32) -> (i32, i32) {
    %c0_i32 = arith.constant 0 : i32
    %c0_i32_0 = arith.constant 0 : i32
    %c0_i32_1 = arith.constant 0 : i32
    return %c0_i32, %c0_i32_0 : i32, i32
  }
  func.func @transform_3(%arg0: i32) -> (i32, i32) {
    %c0_i32 = arith.constant 0 : i32
    %c0_i32_0 = arith.constant 0 : i32
    %c0_i32_1 = arith.constant 0 : i32
    return %c0_i32, %c0_i32_0 : i32, i32
  }
  func.func @transform_4(%arg0: i32) -> (i32, i32) {
    %c0_i32 = arith.constant 0 : i32
    %c0_i32_0 = arith.constant 0 : i32
    %c0_i32_1 = arith.constant 0 : i32
    return %c0_i32, %c0_i32_0 : i32, i32
  }
  func.func @transform_5(%arg0: i32) -> (i32, i32) {
    %c0_i32 = arith.constant 0 : i32
    %c0_i32_0 = arith.constant 0 : i32
    %c0_i32_1 = arith.constant 0 : i32
    return %c0_i32, %c0_i32_0 : i32, i32
  }
  func.func @transform_6(%arg0: i32) -> (i32, i32) {
    %c0_i32 = arith.constant 0 : i32
    %c0_i32_0 = arith.constant 0 : i32
    %c0_i32_1 = arith.constant 0 : i32
    return %c0_i32, %c0_i32_0 : i32, i32
  }
  func.func @transform_7(%arg0: i32) -> (i32, i32) {
    %c0_i32 = arith.constant 0 : i32
    %c0_i32_0 = arith.constant 0 : i32
    return %arg0, %c0_i32 : i32, i32
  }
}

</mosaic_0001>

<llo_original>
// kernel: tpu_custom_call.1
$region0: #{tpu_custom_call.1}
  #allocation0 [shape = 'u32[]', space=smem, size = 0x4, offset = 0x4, fixed_abs, tag = 'smem constant byte address 0x4 - core index']
  #allocation1 [shape = 'u32[72,128]{1,0:T(1,128)}', space=vmem, size = 0x9000, scoped, tag = 'internal scratch']
  %s0 = inlined_call_operand.vmem [shape: bf16[256,32], index: 0, kind: input, shape index: {}]
  %s1 = inlined_call_operand.vmem [shape: bf16[32,128], index: 1, kind: input, shape index: {}]
  %s2 = inlined_call_operand.vmem [shape: f32[1,128], index: 2, kind: input, shape index: {}]
  %s3 = inlined_call_operand.vmem [shape: bf16[128,128], index: 3, kind: input, shape index: {}]
  %s4 = inlined_call_operand.vmem [shape: f32[1,128], index: 4, kind: input, shape index: {}]
  %s5 = inlined_call_operand.vmem [shape: bf16[128,128], index: 5, kind: input, shape index: {}]
  %s6 = inlined_call_operand.vmem [shape: f32[1,128], index: 6, kind: input, shape index: {}]
  %s7 = inlined_call_operand.hbm [shape: f32[256,128], index: 7, kind: output, shape index: {}]
  %s8 = sld [smem:[#allocation0]]
  $region38: #{tpu_custom_call.1} parent=0
    _
  %s10 = ssub.s32 1, %s8
  %s11 = scalar_select 0, %s10, %s8
  $region1: #{tpu_custom_call.1} parent=0
    #allocation2 [shape = 'u8[131072]{0}', space=vmem, size = 0x20000, scoped, tag = 'output window, operand 0, single buffered']
    #allocation3 [shape = 's32[1]{0}', space=sflag, size = 0x4, scoped, tag = 'scoped memory for tpu_custom_call.1']
    %12 = vsyncpa [#allocation3], 0
    // Predicated region
    $region2: #{tpu_custom_call.1} parent=1 // pred_check
      _
    $region3: #{tpu_custom_call.1} parent=1 // pred_check_branch
      %14 = sbr.rel (0) target = $region5
    $region4: #{tpu_custom_call.1} parent=1 // pred_region
      _
    $region5: #{tpu_custom_call.1} parent=1 // pred_fallthru
      _
    // Predicated region
    $region6: #{tpu_custom_call.1} parent=1 // pred_check
      _
    $region7: #{tpu_custom_call.1} parent=1 // pred_check_branch
      %16 = sbr.rel (0) target = $region9
    $region8: #{tpu_custom_call.1} parent=1 // pred_region
      _
    $region9: #{tpu_custom_call.1} parent=1 // pred_fallthru
      _
    // Predicated region
    $region10: #{tpu_custom_call.1} parent=1 // pred_check
      _
    $region11: #{tpu_custom_call.1} parent=1 // pred_check_branch
      %18 = sbr.rel (0) target = $region13
    $region12: #{tpu_custom_call.1} parent=1 // pred_region
      _
    $region13: #{tpu_custom_call.1} parent=1 // pred_fallthru
      _
    // Predicated region
    $region14: #{tpu_custom_call.1} parent=1 // pred_check
      _
    $region15: #{tpu_custom_call.1} parent=1 // pred_check_branch
      %20 = sbr.rel (0) target = $region17
    $region16: #{tpu_custom_call.1} parent=1 // pred_region
      _
    $region17: #{tpu_custom_call.1} parent=1 // pred_fallthru
      _
    // Predicated region
    $region18: #{tpu_custom_call.1} parent=1 // pred_check
      _
    $region19: #{tpu_custom_call.1} parent=1 // pred_check_branch
      %22 = sbr.rel (0) target = $region21
    $region20: #{tpu_custom_call.1} parent=1 // pred_region
      _
    $region21: #{tpu_custom_call.1} parent=1 // pred_fallthru
      _
    // Predicated region
    $region22: #{tpu_custom_call.1} parent=1 // pred_check
      _
    $region23: #{tpu_custom_call.1} parent=1 // pred_check_branch
      %24 = sbr.rel (0) target = $region25
    $region24: #{tpu_custom_call.1} parent=1 // pred_region
      _
    $region25: #{tpu_custom_call.1} parent=1 // pred_fallthru
      _
    // Predicated region
    $region26: #{tpu_custom_call.1} parent=1 // pred_check
      _
    $region27: #{tpu_custom_call.1} parent=1 // pred_check_branch
      %26 = sbr.rel (0) target = $region29
    $region28: #{tpu_custom_call.1} parent=1 // pred_region
      _
    $region29: #{tpu_custom_call.1} parent=1 // pred_fallthru
      _
    %v28 = vld [vmem:[%s0] sm:$0xf]
    %v29 = vld [vmem:[%s0 + $0x4] sm:$0xf]
    %v30 = vld [vmem:[%s0 + $0x8] sm:$0xf]
    %v31 = vld [vmem:[%s0 + $0xc] sm:$0xf]
    %v32 = vld [vmem:[%s0 + $0x10] sm:$0xf]
    %v33 = vld [vmem:[%s0 + $0x14] sm:$0xf]
    %v34 = vld [vmem:[%s0 + $0x18] sm:$0xf]
    %v35 = vld [vmem:[%s0 + $0x1c] sm:$0xf]
    %v36 = vld [vmem:[%s0 + $0x20] sm:$0xf]
    %v37 = vld [vmem:[%s0 + $0x24] sm:$0xf]
    %v38 = vld [vmem:[%s0 + $0x28] sm:$0xf]
    %v39 = vld [vmem:[%s0 + $0x2c] sm:$0xf]
    %v40 = vld [vmem:[%s0 + $0x30] sm:$0xf]
    %v41 = vld [vmem:[%s0 + $0x34] sm:$0xf]
    %v42 = vld [vmem:[%s0 + $0x38] sm:$0xf]
    %v43 = vld [vmem:[%s0 + $0x3c] sm:$0xf]
    %v44 = vld [vmem:[%s0 + $0x40] sm:$0xf]
    %v45 = vld [vmem:[%s0 + $0x44] sm:$0xf]
    %v46 = vld [vmem:[%s0 + $0x48] sm:$0xf]
    %v47 = vld [vmem:[%s0 + $0x4c] sm:$0xf]
    %v48 = vld [vmem:[%s0 + $0x50] sm:$0xf]
    %v49 = vld [vmem:[%s0 + $0x54] sm:$0xf]
    %v50 = vld [vmem:[%s0 + $0x58] sm:$0xf]
    %v51 = vld [vmem:[%s0 + $0x5c] sm:$0xf]
    %v52 = vld [vmem:[%s0 + $0x60] sm:$0xf]
    %v53 = vld [vmem:[%s0 + $0x64] sm:$0xf]
    %v54 = vld [vmem:[%s0 + $0x68] sm:$0xf]
    %v55 = vld [vmem:[%s0 + $0x6c] sm:$0xf]
    %v56 = vld [vmem:[%s0 + $0x70] sm:$0xf]
    %v57 = vld [vmem:[%s0 + $0x74] sm:$0xf]
    %v58 = vld [vmem:[%s0 + $0x78] sm:$0xf]
    %v59 = vld [vmem:[%s0 + $0x7c] sm:$0xf]
    %v60 = vld [vmem:[%s1] sm:$0xf]
    %v61 = vld [vmem:[%s1 + $0x4] sm:$0xf]
    %v62 = vld [vmem:[%s1 + $0x8] sm:$0xf]
    %v63 = vld [vmem:[%s1 + $0xc] sm:$0xf]
    %v64 = vld [vmem:[%s2] sm:$0x1]
    %v66 = vperm.slane %v64, 0
    %v100 = vunpack.c.l.b16 %v28
    %v101 = vunpack.c.l.b16 %v29
    %v102 = vunpack.c.l.b16 %v30
    %v103 = vunpack.c.l.b16 %v31
    %v104 = vunpack.c.l.b16 %v32
    %v105 = vunpack.c.l.b16 %v33
    %v106 = vunpack.c.l.b16 %v34
    %v107 = vunpack.c.l.b16 %v35
    %v108 = vunpack.c.l.b16 %v36
    %v109 = vunpack.c.l.b16 %v37
    %v110 = vunpack.c.l.b16 %v38
    %v111 = vunpack.c.l.b16 %v39
    %v112 = vunpack.c.l.b16 %v40
    %v113 = vunpack.c.l.b16 %v41
    %v114 = vunpack.c.l.b16 %v42
    %v115 = vunpack.c.l.b16 %v43
    %v116 = vunpack.c.l.b16 %v44
    %v117 = vunpack.c.l.b16 %v45
    %v118 = vunpack.c.l.b16 %v46
    %v119 = vunpack.c.l.b16 %v47
    %v120 = vunpack.c.l.b16 %v48
    %v121 = vunpack.c.l.b16 %v49
    %v122 = vunpack.c.l.b16 %v50
    %v123 = vunpack.c.l.b16 %v51
    %v124 = vunpack.c.l.b16 %v52
    %v125 = vunpack.c.l.b16 %v53
    %v126 = vunpack.c.l.b16 %v54
    %v127 = vunpack.c.l.b16 %v55
    %v128 = vunpack.c.l.b16 %v56
    %v129 = vunpack.c.l.b16 %v57
    %v130 = vunpack.c.l.b16 %v58
    %v131 = vunpack.c.l.b16 %v59
    %v132 = vpack.c.b16 %v101, %v100
    %v133 = vpack.c.b16 %v103, %v102
    %v134 = vpack.c.b16 %v105, %v104
    %v135 = vpack.c.b16 %v107, %v106
    %v136 = vpack.c.b16 %v109, %v108
    %v137 = vpack.c.b16 %v111, %v110
    %v138 = vpack.c.b16 %v113, %v112
    %v139 = vpack.c.b16 %v115, %v114
    %v140 = vpack.c.b16 %v117, %v116
    %v141 = vpack.c.b16 %v119, %v118
    %v142 = vpack.c.b16 %v121, %v120
    %v143 = vpack.c.b16 %v123, %v122
    %v144 = vpack.c.b16 %v125, %v124
    %v145 = vpack.c.b16 %v127, %v126
    %v146 = vpack.c.b16 %v129, %v128
    %v147 = vpack.c.b16 %v131, %v130
    %v152 = vunpack.c.l.b16 %v60
    %v153 = vunpack.c.l.b16 %v61
    %v154 = vunpack.c.l.b16 %v62
    %v155 = vunpack.c.l.b16 %v63
    %v156 = vpack.c.b16 %v153, %v152
    %v157 = vpack.c.b16 %v155, %v154
    %vm160 = vcmask 261120
    %v162 = vsel %vm160, %v132, 0
    %v165 = vsel %vm160, %v133, 0
    %v168 = vsel %vm160, %v134, 0
    %v171 = vsel %vm160, %v135, 0
    %v174 = vsel %vm160, %v136, 0
    %v177 = vsel %vm160, %v137, 0
    %v180 = vsel %vm160, %v138, 0
    %v183 = vsel %vm160, %v139, 0
    %v186 = vsel %vm160, %v140, 0
    %v189 = vsel %vm160, %v141, 0
    %v192 = vsel %vm160, %v142, 0
    %v195 = vsel %vm160, %v143, 0
    %v198 = vsel %vm160, %v144, 0
    %v201 = vsel %vm160, %v145, 0
    %v204 = vsel %vm160, %v146, 0
    %v207 = vsel %vm160, %v147, 0
    %209 = vmatpush.bf16.msra.mxu0 0
    %210 = vmatpush.bf16.msra.mxu0 0
    %211 = vmatpush.bf16.msra.mxu0 0
    %212 = vmatpush.bf16.msra.mxu0 0
    %213 = vmatpush.bf16.msra.mxu0 0
    %214 = vmatpush.bf16.msra.mxu0 0
    %215 = vmatpush.bf16.msra.mxu0 %v157
    %216 = vmatpush.bf16.msra.mxu0 %v156
    %217 = vmatmul.bf16.gmra.mxu0 %v162
    %v218 = vpop.f32.mrf.mxu0
    %v219 = vadd.f32 %v66, %v218
    %v220 = vpop.f32.mrf.mxu0
    %v221 = vadd.f32 %v66, %v220
    %222 = vmatmul.bf16.gmra.mxu0 %v165
    %v223 = vpop.f32.mrf.mxu0
    %v224 = vadd.f32 %v66, %v223
    %v225 = vpop.f32.mrf.mxu0
    %v226 = vadd.f32 %v66, %v225
    %227 = vmatmul.bf16.gmra.mxu0 %v168
    %v228 = vpop.f32.mrf.mxu0
    %v229 = vadd.f32 %v66, %v228
    %v230 = vpop.f32.mrf.mxu0
    %v231 = vadd.f32 %v66, %v230
    %232 = vmatmul.bf16.gmra.mxu0 %v171
    %v233 = vpop.f32.mrf.mxu0
    %v234 = vadd.f32 %v66, %v233
    %v235 = vpop.f32.mrf.mxu0
    %v236 = vadd.f32 %v66, %v235
    %237 = vmatmul.bf16.gmra.mxu0 %v174
    %v238 = vpop.f32.mrf.mxu0
    %v239 = vadd.f32 %v66, %v238
    %v240 = vpop.f32.mrf.mxu0
    %v241 = vadd.f32 %v66, %v240
    %242 = vmatmul.bf16.gmra.mxu0 %v177
    %v243 = vpop.f32.mrf.mxu0
    %v244 = vadd.f32 %v66, %v243
    %v245 = vpop.f32.mrf.mxu0
    %v246 = vadd.f32 %v66, %v245
    %247 = vmatmul.bf16.gmra.mxu0 %v180
    %v248 = vpop.f32.mrf.mxu0
    %v249 = vadd.f32 %v66, %v248
    %v250 = vpop.f32.mrf.mxu0
    %v251 = vadd.f32 %v66, %v250
    %252 = vmatmul.bf16.gmra.mxu0 %v183
    %v253 = vpop.f32.mrf.mxu0
    %v254 = vadd.f32 %v66, %v253
    %v255 = vpop.f32.mrf.mxu0
    %v256 = vadd.f32 %v66, %v255
    %257 = vmatmul.bf16.gmra.mxu0 %v186
    %v258 = vpop.f32.mrf.mxu0
    %v259 = vadd.f32 %v66, %v258
    %v260 = vpop.f32.mrf.mxu0
    %v261 = vadd.f32 %v66, %v260
    %262 = vmatmul.bf16.gmra.mxu0 %v189
    %v263 = vpop.f32.mrf.mxu0
    %v264 = vadd.f32 %v66, %v263
    %v265 = vpop.f32.mrf.mxu0
    %v266 = vadd.f32 %v66, %v265
    %267 = vmatmul.bf16.gmra.mxu0 %v192
    %v268 = vpop.f32.mrf.mxu0
    %v269 = vadd.f32 %v66, %v268
    %v270 = vpop.f32.mrf.mxu0
    %v271 = vadd.f32 %v66, %v270
    %272 = vmatmul.bf16.gmra.mxu0 %v195
    %v273 = vpop.f32.mrf.mxu0
    %v274 = vadd.f32 %v66, %v273
    %v275 = vpop.f32.mrf.mxu0
    %v276 = vadd.f32 %v66, %v275
    %277 = vmatmul.bf16.gmra.mxu0 %v198
    %v278 = vpop.f32.mrf.mxu0
    %v279 = vadd.f32 %v66, %v278
    %v280 = vpop.f32.mrf.mxu0
    %v281 = vadd.f32 %v66, %v280
    %282 = vmatmul.bf16.gmra.mxu0 %v201
    %v283 = vpop.f32.mrf.mxu0
    %v284 = vadd.f32 %v66, %v283
    %v285 = vpop.f32.mrf.mxu0
    %v286 = vadd.f32 %v66, %v285
    %287 = vmatmul.bf16.gmra.mxu0 %v204
    %v288 = vpop.f32.mrf.mxu0
    %v289 = vadd.f32 %v66, %v288
    %v290 = vpop.f32.mrf.mxu0
    %v291 = vadd.f32 %v66, %v290
    %292 = vmatmul.bf16.gmra.mxu0 %v207
    %v293 = vpop.f32.mrf.mxu0
    %v294 = vadd.f32 %v66, %v293
    %v295 = vpop.f32.mrf.mxu0
    %v296 = vadd.f32 %v66, %v295
    %297 = vdwg.mxu0
    %v298 = vmax.f32 %v219, 0.0
    %v299 = vmax.f32 %v221, 0.0
    %v300 = vmax.f32 %v224, 0.0
    %v301 = vmax.f32 %v226, 0.0
    %v302 = vmax.f32 %v229, 0.0
    %v303 = vmax.f32 %v231, 0.0
    %v304 = vmax.f32 %v234, 0.0
    %v305 = vmax.f32 %v236, 0.0
    %v306 = vmax.f32 %v239, 0.0
    %v307 = vmax.f32 %v241, 0.0
    %v308 = vmax.f32 %v244, 0.0
    %v309 = vmax.f32 %v246, 0.0
    %v310 = vmax.f32 %v249, 0.0
    %v311 = vmax.f32 %v251, 0.0
    %v312 = vmax.f32 %v254, 0.0
    %v313 = vmax.f32 %v256, 0.0
    %v314 = vmax.f32 %v259, 0.0
    %v315 = vmax.f32 %v261, 0.0
    %v316 = vmax.f32 %v264, 0.0
    %v317 = vmax.f32 %v266, 0.0
    %v318 = vmax.f32 %v269, 0.0
    %v319 = vmax.f32 %v271, 0.0
    %v320 = vmax.f32 %v274, 0.0
    %v321 = vmax.f32 %v276, 0.0
    %v322 = vmax.f32 %v279, 0.0
    %v323 = vmax.f32 %v281, 0.0
    %v324 = vmax.f32 %v284, 0.0
    %v325 = vmax.f32 %v286, 0.0
    %v326 = vmax.f32 %v289, 0.0
    %v327 = vmax.f32 %v291, 0.0
    %v328 = vmax.f32 %v294, 0.0
    %v329 = vmax.f32 %v296, 0.0
    %v330 = vpack.c.bf16 %v299, %v298
    %v331 = vpack.c.bf16 %v301, %v300
    %v332 = vpack.c.bf16 %v303, %v302
    %v333 = vpack.c.bf16 %v305, %v304
    %v334 = vpack.c.bf16 %v307, %v306
    %v335 = vpack.c.bf16 %v309, %v308
    %v336 = vpack.c.bf16 %v311, %v310
    %v337 = vpack.c.bf16 %v313, %v312
    %v338 = vpack.c.bf16 %v315, %v314
    %v339 = vpack.c.bf16 %v317, %v316
    %v340 = vpack.c.bf16 %v319, %v318
    %v341 = vpack.c.bf16 %v321, %v320
    %v342 = vpack.c.bf16 %v323, %v322
    %v343 = vpack.c.bf16 %v325, %v324
    %v344 = vpack.c.bf16 %v327, %v326
    %v345 = vpack.c.bf16 %v329, %v328
    %v346 = vld [vmem:[%s3] sm:$0xf]
    %v347 = vld [vmem:[%s3 + $0x4] sm:$0xf]
    %v348 = vld [vmem:[%s3 + $0x8] sm:$0xf]
    %v349 = vld [vmem:[%s3 + $0xc] sm:$0xf]
    %v350 = vld [vmem:[%s3 + $0x10] sm:$0xf]
    %v351 = vld [vmem:[%s3 + $0x14] sm:$0xf]
    %v352 = vld [vmem:[%s3 + $0x18] sm:$0xf]
    %v353 = vld [vmem:[%s3 + $0x1c] sm:$0xf]
    %v354 = vld [vmem:[%s3 + $0x20] sm:$0xf]
    %v355 = vld [vmem:[%s3 + $0x24] sm:$0xf]
    %v356 = vld [vmem:[%s3 + $0x28] sm:$0xf]
    %v357 = vld [vmem:[%s3 + $0x2c] sm:$0xf]
    %v358 = vld [vmem:[%s3 + $0x30] sm:$0xf]
    %v359 = vld [vmem:[%s3 + $0x34] sm:$0xf]
    %v360 = vld [vmem:[%s3 + $0x38] sm:$0xf]
    %v361 = vld [vmem:[%s3 + $0x3c] sm:$0xf]
    %v362 = vld [vmem:[%s4] sm:$0x1]
    %v364 = vperm.slane %v362, 0
    %v382 = vunpack.c.l.b16 %v346
    %v383 = vunpack.c.l.b16 %v347
    %v384 = vunpack.c.l.b16 %v348
    %v385 = vunpack.c.l.b16 %v349
    %v386 = vunpack.c.l.b16 %v350
    %v387 = vunpack.c.l.b16 %v351
    %v388 = vunpack.c.l.b16 %v352
    %v389 = vunpack.c.l.b16 %v353
    %v390 = vunpack.c.l.b16 %v354
    %v391 = vunpack.c.l.b16 %v355
    %v392 = vunpack.c.l.b16 %v356
    %v393 = vunpack.c.l.b16 %v357
    %v394 = vunpack.c.l.b16 %v358
    %v395 = vunpack.c.l.b16 %v359
    %v396 = vunpack.c.l.b16 %v360
    %v397 = vunpack.c.l.b16 %v361
    %v398 = vpack.c.b16 %v383, %v382
    %v399 = vpack.c.b16 %v385, %v384
    %v400 = vpack.c.b16 %v387, %v386
    %v401 = vpack.c.b16 %v389, %v388
    %v402 = vpack.c.b16 %v391, %v390
    %v403 = vpack.c.b16 %v393, %v392
    %v404 = vpack.c.b16 %v395, %v394
    %v405 = vpack.c.b16 %v397, %v396
    %414 = vmatpush.bf16.msra.mxu0 %v405
    %415 = vmatpush.bf16.msra.mxu0 %v404
    %416 = vmatpush.bf16.msra.mxu0 %v403
    %417 = vmatpush.bf16.msra.mxu0 %v402
    %418 = vmatpush.bf16.msra.mxu0 %v401
    %419 = vmatpush.bf16.msra.mxu0 %v400
    %420 = vmatpush.bf16.msra.mxu0 %v399
    %421 = vmatpush.bf16.msra.mxu0 %v398
    %422 = vmatmul.bf16.gmra.mxu0 %v330
    %v423 = vpop.f32.mrf.mxu0
    %v424 = vadd.f32 %v364, %v423
    %v425 = vpop.f32.mrf.mxu0
    %v426 = vadd.f32 %v364, %v425
    %427 = vmatmul.bf16.gmra.mxu0 %v331
    %v428 = vpop.f32.mrf.mxu0
    %v429 = vadd.f32 %v364, %v428
    %v430 = vpop.f32.mrf.mxu0
    %v431 = vadd.f32 %v364, %v430
    %432 = vmatmul.bf16.gmra.mxu0 %v332
    %v433 = vpop.f32.mrf.mxu0
    %v434 = vadd.f32 %v364, %v433
    %v435 = vpop.f32.mrf.mxu0
    %v436 = vadd.f32 %v364, %v435
    %437 = vmatmul.bf16.gmra.mxu0 %v333
    %v438 = vpop.f32.mrf.mxu0
    %v439 = vadd.f32 %v364, %v438
    %v440 = vpop.f32.mrf.mxu0
    %v441 = vadd.f32 %v364, %v440
    %442 = vmatmul.bf16.gmra.mxu0 %v334
    %v443 = vpop.f32.mrf.mxu0
    %v444 = vadd.f32 %v364, %v443
    %v445 = vpop.f32.mrf.mxu0
    %v446 = vadd.f32 %v364, %v445
    %447 = vmatmul.bf16.gmra.mxu0 %v335
    %v448 = vpop.f32.mrf.mxu0
    %v449 = vadd.f32 %v364, %v448
    %v450 = vpop.f32.mrf.mxu0
    %v451 = vadd.f32 %v364, %v450
    %452 = vmatmul.bf16.gmra.mxu0 %v336
    %v453 = vpop.f32.mrf.mxu0
    %v454 = vadd.f32 %v364, %v453
    %v455 = vpop.f32.mrf.mxu0
    %v456 = vadd.f32 %v364, %v455
    %457 = vmatmul.bf16.gmra.mxu0 %v337
    %v458 = vpop.f32.mrf.mxu0
    %v459 = vadd.f32 %v364, %v458
    %v460 = vpop.f32.mrf.mxu0
    %v461 = vadd.f32 %v364, %v460
    %462 = vmatmul.bf16.gmra.mxu0 %v338
    %v463 = vpop.f32.mrf.mxu0
    %v464 = vadd.f32 %v364, %v463
    %v465 = vpop.f32.mrf.mxu0
    %v466 = vadd.f32 %v364, %v465
    %467 = vmatmul.bf16.gmra.mxu0 %v339
    %v468 = vpop.f32.mrf.mxu0
    %v469 = vadd.f32 %v364, %v468
    %v470 = vpop.f32.mrf.mxu0
    %v471 = vadd.f32 %v364, %v470
    %472 = vmatmul.bf16.gmra.mxu0 %v340
    %v473 = vpop.f32.mrf.mxu0
    %v474 = vadd.f32 %v364, %v473
    %v475 = vpop.f32.mrf.mxu0
    %v476 = vadd.f32 %v364, %v475
    %477 = vmatmul.bf16.gmra.mxu0 %v341
    %v478 = vpop.f32.mrf.mxu0
    %v479 = vadd.f32 %v364, %v478
    %v480 = vpop.f32.mrf.mxu0
    %v481 = vadd.f32 %v364, %v480
    %482 = vmatmul.bf16.gmra.mxu0 %v342
    %v483 = vpop.f32.mrf.mxu0
    %v484 = vadd.f32 %v364, %v483
    %v485 = vpop.f32.mrf.mxu0
    %v486 = vadd.f32 %v364, %v485
    %487 = vmatmul.bf16.gmra.mxu0 %v343
    %v488 = vpop.f32.mrf.mxu0
    %v489 = vadd.f32 %v364, %v488
    %v490 = vpop.f32.mrf.mxu0
    %v491 = vadd.f32 %v364, %v490
    %492 = vmatmul.bf16.gmra.mxu0 %v344
    %v493 = vpop.f32.mrf.mxu0
    %v494 = vadd.f32 %v364, %v493
    %v495 = vpop.f32.mrf.mxu0
    %v496 = vadd.f32 %v364, %v495
    %497 = vmatmul.bf16.gmra.mxu0 %v345
    %v498 = vpop.f32.mrf.mxu0
    %v499 = vadd.f32 %v364, %v498
    %v500 = vpop.f32.mrf.mxu0
    %v501 = vadd.f32 %v364, %v500
    %502 = vdwg.mxu0
    %v503 = vmax.f32 %v424, 0.0
    %v504 = vmax.f32 %v426, 0.0
    %v505 = vmax.f32 %v429, 0.0
    %v506 = vmax.f32 %v431, 0.0
    %v507 = vmax.f32 %v434, 0.0
    %v508 = vmax.f32 %v436, 0.0
    %v509 = vmax.f32 %v439, 0.0
    %v510 = vmax.f32 %v441, 0.0
    %v511 = vmax.f32 %v444, 0.0
    %v512 = vmax.f32 %v446, 0.0
    %v513 = vmax.f32 %v449, 0.0
    %v514 = vmax.f32 %v451, 0.0
    %v515 = vmax.f32 %v454, 0.0
    %v516 = vmax.f32 %v456, 0.0
    %v517 = vmax.f32 %v459, 0.0
    %v518 = vmax.f32 %v461, 0.0
    %v519 = vmax.f32 %v464, 0.0
    %v520 = vmax.f32 %v466, 0.0
    %v521 = vmax.f32 %v469, 0.0
    %v522 = vmax.f32 %v471, 0.0
    %v523 = vmax.f32 %v474, 0.0
    %v524 = vmax.f32 %v476, 0.0
    %v525 = vmax.f32 %v479, 0.0
    %v526 = vmax.f32 %v481, 0.0
    %v527 = vmax.f32 %v484, 0.0
    %v528 = vmax.f32 %v486, 0.0
    %v529 = vmax.f32 %v489, 0.0
    %v530 = vmax.f32 %v491, 0.0
    %v531 = vmax.f32 %v494, 0.0
    %v532 = vmax.f32 %v496, 0.0
    %v533 = vmax.f32 %v499, 0.0
    %v534 = vmax.f32 %v501, 0.0
    %v535 = vpack.c.bf16 %v504, %v503
    %v536 = vpack.c.bf16 %v506, %v505
    %v537 = vpack.c.bf16 %v508, %v507
    %v538 = vpack.c.bf16 %v510, %v509
    %v539 = vpack.c.bf16 %v512, %v511
    %v540 = vpack.c.bf16 %v514, %v513
    %v541 = vpack.c.bf16 %v516, %v515
    %v542 = vpack.c.bf16 %v518, %v517
    %v543 = vpack.c.bf16 %v520, %v519
    %v544 = vpack.c.bf16 %v522, %v521
    %v545 = vpack.c.bf16 %v524, %v523
    %v546 = vpack.c.bf16 %v526, %v525
    %v547 = vpack.c.bf16 %v528, %v527
    %v548 = vpack.c.bf16 %v530, %v529
    %v549 = vpack.c.bf16 %v532, %v531
    %v550 = vpack.c.bf16 %v534, %v533
    %v551 = vld [vmem:[%s5] sm:$0xf]
    %v552 = vld [vmem:[%s5 + $0x4] sm:$0xf]
    %v553 = vld [vmem:[%s5 + $0x8] sm:$0xf]
    %v554 = vld [vmem:[%s5 + $0xc] sm:$0xf]
    %v555 = vld [vmem:[%s5 + $0x10] sm:$0xf]
    %v556 = vld [vmem:[%s5 + $0x14] sm:$0xf]
    %v557 = vld [vmem:[%s5 + $0x18] sm:$0xf]
    %v558 = vld [vmem:[%s5 + $0x1c] sm:$0xf]
    %v559 = vld [vmem:[%s5 + $0x20] sm:$0xf]
    %v560 = vld [vmem:[%s5 + $0x24] sm:$0xf]
    %v561 = vld [vmem:[%s5 + $0x28] sm:$0xf]
    %v562 = vld [vmem:[%s5 + $0x2c] sm:$0xf]
    %v563 = vld [vmem:[%s5 + $0x30] sm:$0xf]
    %v564 = vld [vmem:[%s5 + $0x34] sm:$0xf]
    %v565 = vld [vmem:[%s5 + $0x38] sm:$0xf]
    %v566 = vld [vmem:[%s5 + $0x3c] sm:$0xf]
    %v567 = vld [vmem:[%s6] sm:$0x1]
    %v569 = vperm.slane %v567, 0
    %v587 = vunpack.c.l.b16 %v551
    %v588 = vunpack.c.l.b16 %v552
    %v589 = vunpack.c.l.b16 %v553
    %v590 = vunpack.c.l.b16 %v554
    %v591 = vunpack.c.l.b16 %v555
    %v592 = vunpack.c.l.b16 %v556
    %v593 = vunpack.c.l.b16 %v557
    %v594 = vunpack.c.l.b16 %v558
    %v595 = vunpack.c.l.b16 %v559
    %v596 = vunpack.c.l.b16 %v560
    %v597 = vunpack.c.l.b16 %v561
    %v598 = vunpack.c.l.b16 %v562
    %v599 = vunpack.c.l.b16 %v563
    %v600 = vunpack.c.l.b16 %v564
    %v601 = vunpack.c.l.b16 %v565
    %v602 = vunpack.c.l.b16 %v566
    %v603 = vpack.c.b16 %v588, %v587
    %v604 = vpack.c.b16 %v590, %v589
    %v605 = vpack.c.b16 %v592, %v591
    %v606 = vpack.c.b16 %v594, %v593
    %v607 = vpack.c.b16 %v596, %v595
    %v608 = vpack.c.b16 %v598, %v597
    %v609 = vpack.c.b16 %v600, %v599
    %v610 = vpack.c.b16 %v602, %v601
    %619 = vmatpush.bf16.msra.mxu0 %v610
    %620 = vmatpush.bf16.msra.mxu0 %v609
    %621 = vmatpush.bf16.msra.mxu0 %v608
    %622 = vmatpush.bf16.msra.mxu0 %v607
    %623 = vmatpush.bf16.msra.mxu0 %v606
    %624 = vmatpush.bf16.msra.mxu0 %v605
    %625 = vmatpush.bf16.msra.mxu0 %v604
    %626 = vmatpush.bf16.msra.mxu0 %v603
    %627 = vmatmul.bf16.gmra.mxu0 %v535
    %v628 = vpop.f32.mrf.mxu0
    %v629 = vadd.f32 %v569, %v628
    %v630 = vpop.f32.mrf.mxu0
    %v631 = vadd.f32 %v569, %v630
    %632 = vmatmul.bf16.gmra.mxu0 %v536
    %v633 = vpop.f32.mrf.mxu0
    %v634 = vadd.f32 %v569, %v633
    %v635 = vpop.f32.mrf.mxu0
    %v636 = vadd.f32 %v569, %v635
    %637 = vmatmul.bf16.gmra.mxu0 %v537
    %v638 = vpop.f32.mrf.mxu0
    %v639 = vadd.f32 %v569, %v638
    %v640 = vpop.f32.mrf.mxu0
    %v641 = vadd.f32 %v569, %v640
    %642 = vmatmul.bf16.gmra.mxu0 %v538
    %v643 = vpop.f32.mrf.mxu0
    %v644 = vadd.f32 %v569, %v643
    %v645 = vpop.f32.mrf.mxu0
    %v646 = vadd.f32 %v569, %v645
    %647 = vmatmul.bf16.gmra.mxu0 %v539
    %v648 = vpop.f32.mrf.mxu0
    %v649 = vadd.f32 %v569, %v648
    %v650 = vpop.f32.mrf.mxu0
    %v651 = vadd.f32 %v569, %v650
    %652 = vmatmul.bf16.gmra.mxu0 %v540
    %v653 = vpop.f32.mrf.mxu0
    %v654 = vadd.f32 %v569, %v653
    %v655 = vpop.f32.mrf.mxu0
    %v656 = vadd.f32 %v569, %v655
    %657 = vmatmul.bf16.gmra.mxu0 %v541
    %v658 = vpop.f32.mrf.mxu0
    %v659 = vadd.f32 %v569, %v658
    %v660 = vpop.f32.mrf.mxu0
    %v661 = vadd.f32 %v569, %v660
    %662 = vmatmul.bf16.gmra.mxu0 %v542
    %v663 = vpop.f32.mrf.mxu0
    %v664 = vadd.f32 %v569, %v663
    %v665 = vpop.f32.mrf.mxu0
    %v666 = vadd.f32 %v569, %v665
    %667 = vmatmul.bf16.gmra.mxu0 %v543
    %v668 = vpop.f32.mrf.mxu0
    %v669 = vadd.f32 %v569, %v668
    %v670 = vpop.f32.mrf.mxu0
    %v671 = vadd.f32 %v569, %v670
    %672 = vmatmul.bf16.gmra.mxu0 %v544
    %v673 = vpop.f32.mrf.mxu0
    %v674 = vadd.f32 %v569, %v673
    %v675 = vpop.f32.mrf.mxu0
    %v676 = vadd.f32 %v569, %v675
    %677 = vmatmul.bf16.gmra.mxu0 %v545
    %v678 = vpop.f32.mrf.mxu0
    %v679 = vadd.f32 %v569, %v678
    %v680 = vpop.f32.mrf.mxu0
    %v681 = vadd.f32 %v569, %v680
    %682 = vmatmul.bf16.gmra.mxu0 %v546
    %v683 = vpop.f32.mrf.mxu0
    %v684 = vadd.f32 %v569, %v683
    %v685 = vpop.f32.mrf.mxu0
    %v686 = vadd.f32 %v569, %v685
    %687 = vmatmul.bf16.gmra.mxu0 %v547
    %v688 = vpop.f32.mrf.mxu0
    %v689 = vadd.f32 %v569, %v688
    %v690 = vpop.f32.mrf.mxu0
    %v691 = vadd.f32 %v569, %v690
    %692 = vmatmul.bf16.gmra.mxu0 %v548
    %v693 = vpop.f32.mrf.mxu0
    %v694 = vadd.f32 %v569, %v693
    %v695 = vpop.f32.mrf.mxu0
    %v696 = vadd.f32 %v569, %v695
    %697 = vmatmul.bf16.gmra.mxu0 %v549
    %v698 = vpop.f32.mrf.mxu0
    %v699 = vadd.f32 %v569, %v698
    %v700 = vpop.f32.mrf.mxu0
    %v701 = vadd.f32 %v569, %v700
    %702 = vmatmul.bf16.gmra.mxu0 %v550
    %v703 = vpop.f32.mrf.mxu0
    %v704 = vadd.f32 %v569, %v703
    %v705 = vpop.f32.mrf.mxu0
    %v706 = vadd.f32 %v569, %v705
    %707 = vdwg.mxu0
    %708 = vst [vmem:[#allocation2] sm:$0xff] %v629
    %709 = vst [vmem:[#allocation2 + $0x8] sm:$0xff] %v631
    %710 = vst [vmem:[#allocation2 + $0x10] sm:$0xff] %v634
    %711 = vst [vmem:[#allocation2 + $0x18] sm:$0xff] %v636
    %712 = vst [vmem:[#allocation2 + $0x20] sm:$0xff] %v639
    %713 = vst [vmem:[#allocation2 + $0x28] sm:$0xff] %v641
    %714 = vst [vmem:[#allocation2 + $0x30] sm:$0xff] %v644
    %715 = vst [vmem:[#allocation2 + $0x38] sm:$0xff] %v646
    %716 = vst [vmem:[#allocation2 + $0x40] sm:$0xff] %v649
    %717 = vst [vmem:[#allocation2 + $0x48] sm:$0xff] %v651
    %718 = vst [vmem:[#allocation2 + $0x50] sm:$0xff] %v654
    %719 = vst [vmem:[#allocation2 + $0x58] sm:$0xff] %v656
    %720 = vst [vmem:[#allocation2 + $0x60] sm:$0xff] %v659
    %721 = vst [vmem:[#allocation2 + $0x68] sm:$0xff] %v661
    %722 = vst [vmem:[#allocation2 + $0x70] sm:$0xff] %v664
    %723 = vst [vmem:[#allocation2 + $0x78] sm:$0xff] %v666
    %724 = vst [vmem:[#allocation2 + $0x80] sm:$0xff] %v669
    %725 = vst [vmem:[#allocation2 + $0x88] sm:$0xff] %v671
    %726 = vst [vmem:[#allocation2 + $0x90] sm:$0xff] %v674
    %727 = vst [vmem:[#allocation2 + $0x98] sm:$0xff] %v676
    %728 = vst [vmem:[#allocation2 + $0xa0] sm:$0xff] %v679
    %729 = vst [vmem:[#allocation2 + $0xa8] sm:$0xff] %v681
    %730 = vst [vmem:[#allocation2 + $0xb0] sm:$0xff] %v684
    %731 = vst [vmem:[#allocation2 + $0xb8] sm:$0xff] %v686
    %732 = vst [vmem:[#allocation2 + $0xc0] sm:$0xff] %v689
    %733 = vst [vmem:[#allocation2 + $0xc8] sm:$0xff] %v691
    %734 = vst [vmem:[#allocation2 + $0xd0] sm:$0xff] %v694
    %735 = vst [vmem:[#allocation2 + $0xd8] sm:$0xff] %v696
    %736 = vst [vmem:[#allocation2 + $0xe0] sm:$0xff] %v699
    %737 = vst [vmem:[#allocation2 + $0xe8] sm:$0xff] %v701
    %738 = vst [vmem:[#allocation2 + $0xf0] sm:$0xff] %v704
    %739 = vst [vmem:[#allocation2 + $0xf8] sm:$0xff] %v706
    // Predicated region
    $region30: #{tpu_custom_call.1} parent=1 // pred_check
      _
    $region31: #{tpu_custom_call.1} parent=1 // pred_check_branch
      %741 = sbr.rel (0) target = $region33
    $region32: #{tpu_custom_call.1} parent=1 // pred_region
      %743 = vsyncadd [#allocation3], 0
      %s744 = sshll.u32 [#allocation2], 4
      %s745 = int_to_ptr.vmem [resolvable:$true] %s744
      %s746 = sshll.u32 %s7, 4
      %s747 = int_to_ptr.hbm [resolvable:$true] %s746
      %752 = dma.vmem_to_hbm [thread:$0]  %s745, 4096, %s747, [#allocation3], 128, 128, 8
    $region33: #{tpu_custom_call.1} parent=1 // pred_fallthru
      _
    // Predicated region
    $region34: #{tpu_custom_call.1} parent=1 // pred_check
      _
    $region35: #{tpu_custom_call.1} parent=1 // pred_check_branch
      %754 = sbr.rel (0) target = $region37
    $region36: #{tpu_custom_call.1} parent=1 // pred_region
      %756 = dma.done [#allocation3], 4096
    $region37: #{tpu_custom_call.1} parent=1 // pred_fallthru
      _
    %757 = vsyncpa [#allocation3], 1

</llo_original>
